<compile_context>
chip_gen: v7x
topology: tpu7x:2x2x1
jax: 0.10.0
libtpu: 0.0.40
codegen_flags: <defaults>
</compile_context>

<pallas_src>
import functools
import math

import jax
import jax.numpy as jnp
from jax.experimental import pallas as pl
from jax.experimental.pallas import tpu as pltpu

LN_EPS = 1e-5  # PyTorch nn.LayerNorm default


def _round_up(n, m):
    return ((n + m - 1) // m) * m


def _vmem_budget_bytes():
    """~85% of per-core VMEM; conservative 64 MiB (v7x) if the query fails."""
    cap = None
    try:
        cap = getattr(pltpu.get_tpu_info(), "vmem_capacity_bytes", None)
    except Exception:
        cap = None
    if not cap:
        cap = 64 * 1024 * 1024
    return int(cap * 0.85)


def _estimate_vmem_single(tm, dp, hp, w_bytes):
    """Conservative VMEM estimate for the resident-weight (n_k == 1) path."""
    act = tm * dp * (2 * 4 + 2 * 4)          # x + out blocks, double-buffered f32
    weights = 2 * 2 * dp * hp * w_bytes      # W1 + W2 (assume 2 buffers)
    biases = 2 * 4 * (hp + 3 * dp)
    interm = 2 * tm * hp * 4                 # fc1 / ReLU intermediates (f32)
    return act + weights + biases + interm


def _estimate_vmem_multi(tm, dp, th, w_bytes):
    """Conservative VMEM estimate for the hidden-reduction (n_k > 1) path."""
    act = tm * dp * (2 * 4 + 2 * 4)
    weights = 2 * 2 * dp * th * w_bytes
    biases = 2 * 4 * (th + 3 * dp)
    scratch = tm * dp * (2 + 4)              # xn (bf16) + acc (f32) scratch
    interm = 2 * tm * th * 4
    return act + weights + biases + scratch + interm


def _layer_norm(x_f32, gamma, beta, d_real, d_pad):
    """Two-pass LayerNorm over the last axis.  Columns >= d_real (zero padding)
    are masked so the padded statistics equal the real-D statistics."""
    inv_d = 1.0 / d_real
    mean = jnp.sum(x_f32, axis=-1, keepdims=True) * inv_d
    xc = x_f32 - mean
    if d_pad > d_real:
        col = jax.lax.broadcasted_iota(jnp.int32, (1, d_pad), 1)
        xc = jnp.where(col < d_real, xc, 0.0)
    var = jnp.sum(xc * xc, axis=-1, keepdims=True) * inv_d
    # padded gamma/beta are zero, so padded output columns stay zero.
    return xc * jax.lax.rsqrt(var + LN_EPS) * gamma + beta


def _ffn_kernel_single(x_ref, gamma_ref, beta_ref, w1_ref, b1_ref, w2_ref,
                       b2_ref, o_ref, *, d_real, d_pad, compute_dtype):
    """Resident-weight path: grid = (row_tiles,), whole hidden dim per step."""
    x = x_ref[...].astype(jnp.float32)
    xn = _layer_norm(x, gamma_ref[...], beta_ref[...], d_real, d_pad)
    h = jnp.dot(xn.astype(compute_dtype), w1_ref[...],
                preferred_element_type=jnp.float32)
    h = jnp.maximum(h + b1_ref[...], 0.0)
    y = jnp.dot(h.astype(compute_dtype), w2_ref[...],
                preferred_element_type=jnp.float32)
    o_ref[...] = (y + b2_ref[...] + x).astype(o_ref.dtype)


def _ffn_kernel_multi(x_ref, gamma_ref, beta_ref, w1_ref, b1_ref, w2_ref,
                      b2_ref, o_ref, xn_ref, acc_ref, *, d_real, d_pad,
                      compute_dtype):
    """Hidden-reduction path: grid = (row_tiles, hidden_tiles), f32 accumulator."""
    k = pl.program_id(1)

    @pl.when(k == 0)
    def _():
        x = x_ref[...].astype(jnp.float32)
        xn = _layer_norm(x, gamma_ref[...], beta_ref[...], d_real, d_pad)
        xn_ref[...] = xn.astype(xn_ref.dtype)   # bf16 MXU operand, computed once

    h = jnp.dot(xn_ref[...], w1_ref[...], preferred_element_type=jnp.float32)
    h = jnp.maximum(h + b1_ref[...], 0.0)
    part = jnp.dot(h.astype(compute_dtype), w2_ref[...],
                   preferred_element_type=jnp.float32)

    @pl.when(k == 0)
    def _():
        acc_ref[...] = part + b2_ref[...]       # fold b2 into the init store

    @pl.when(k > 0)
    def _():
        acc_ref[...] += part

    @pl.when(k == pl.num_programs(1) - 1)
    def _():
        o_ref[...] = (acc_ref[...]
                      + x_ref[...].astype(jnp.float32)).astype(o_ref.dtype)


class PallasFeedForwardBlock:
    """LayerNorm -> fc1 -> ReLU -> fc2 -> + residual (dropout/droppath identity).

    Pads and bf16-casts the parameters once at construction (hoisted out of the
    per-call path) and picks tiling from the chip's VMEM budget.
    """

    def __init__(self, gamma, beta, w1, b1, w2, b2, *, tm=512, th=None,
                 compute_dtype=jnp.bfloat16):
        D, H = w1.shape
        assert w2.shape == (H, D)
        self.D, self.H = D, H
        self.tm = max(16, int(tm))
        self.compute_dtype = compute_dtype
        self.w_bytes = jnp.dtype(compute_dtype).itemsize
        self.budget = _vmem_budget_bytes()

        # 256-alignment for the 256-wide MXUs on v6e/v7x when padding is cheap.
        d_align = 256 if D >= 512 else 128
        h_align = 256 if H >= 512 else 128
        Dp = _round_up(D, d_align)
        Hp0 = _round_up(H, h_align)

        if th is not None:
            th_eff = min(Hp0, max(h_align, _round_up(int(th), h_align)))
        elif _estimate_vmem_single(self.tm, Dp, Hp0, self.w_bytes) <= self.budget:
            th_eff = Hp0                       # full hidden residency, n_k == 1
        else:
            th_eff = min(Hp0, 512)
        self.single_k = th_eff >= Hp0
        Hp = Hp0 if self.single_k else _round_up(Hp0, th_eff)
        self.Dp, self.Hp, self.th_eff = Dp, Hp, th_eff
        self.n_k = 1 if self.single_k else Hp // th_eff

        # One-time padded / casted parameter copies (zero padding is inert:
        # padded gamma/beta/b1/b2 and padded weight rows/cols are zero).
        self.gamma = jnp.pad(gamma, (0, Dp - D)).reshape(1, Dp).astype(jnp.float32)
        self.beta = jnp.pad(beta, (0, Dp - D)).reshape(1, Dp).astype(jnp.float32)
        self.w1 = jnp.pad(w1, ((0, Dp - D), (0, Hp - H))).astype(compute_dtype)
        self.b1 = jnp.pad(b1, (0, Hp - H)).reshape(1, Hp).astype(jnp.float32)
        self.w2 = jnp.pad(w2, ((0, Hp - H), (0, Dp - D))).astype(compute_dtype)
        self.b2 = jnp.pad(b2, (0, Dp - D)).reshape(1, Dp).astype(jnp.float32)

        self._try_single_buffer = True         # pl.Buffered(1) on const blocks

    # --- row geometry ------------------------------------------------------
    def _row_tiling(self, N):
        tm_eff = min(self.tm, _round_up(N, 16))
        # v7x megacore: keep >= 2 tiles on the "parallel" row axis when possible.
        if _round_up(N, tm_eff) // tm_eff == 1 and tm_eff > 16:
            tm_eff = _round_up((tm_eff + 1) // 2, 16)
        # Keep the conservative VMEM estimate inside the budget.
        while tm_eff > 64:
            if self.single_k:
                est = _estimate_vmem_single(tm_eff, self.Dp, self.Hp, self.w_bytes)
            else:
                est = _estimate_vmem_multi(tm_eff, self.Dp, self.th_eff, self.w_bytes)
            if est <= self.budget:
                break
            tm_eff = max(64, _round_up(tm_eff // 2, 16))
        Np = _round_up(N, tm_eff)
        return tm_eff, Np, Np // tm_eff

    # --- pallas_call builder -------------------------------------------------
    def _build(self, tm_eff, Np, n_row, out_dtype, single_buffer):
        Dp, Hp, th, n_k = self.Dp, self.Hp, self.th_eff, self.n_k

        def const_spec(shape, index_map):
            # Constant block index across the whole grid -> one buffer suffices.
            if single_buffer:
                return pl.BlockSpec(shape, index_map, pipeline_mode=pl.Buffered(1))
            return pl.BlockSpec(shape, index_map)

        if self.single_k:
            kernel = functools.partial(_ffn_kernel_single, d_real=self.D,
                                       d_pad=Dp, compute_dtype=self.compute_dtype)
            grid_spec = pltpu.PrefetchScalarGridSpec(
                num_scalar_prefetch=0,
                grid=(n_row,),
                in_specs=[
                    pl.BlockSpec((tm_eff, Dp), lambda i: (i, 0)),      # x tile
                    const_spec((1, Dp), lambda i: (0, 0)),             # gamma
                    const_spec((1, Dp), lambda i: (0, 0)),             # beta
                    const_spec((Dp, Hp), lambda i: (0, 0)),            # W1 resident
                    const_spec((1, Hp), lambda i: (0, 0)),             # b1
                    const_spec((Hp, Dp), lambda i: (0, 0)),            # W2 resident
                    const_spec((1, Dp), lambda i: (0, 0)),             # b2
                ],
                out_specs=pl.BlockSpec((tm_eff, Dp), lambda i: (i, 0)),
                scratch_shapes=[],
            )
            semantics = ("parallel",)
        else:
            kernel = functools.partial(_ffn_kernel_multi, d_real=self.D,
                                       d_pad=Dp, compute_dtype=self.compute_dtype)
            grid_spec = pltpu.PrefetchScalarGridSpec(
                num_scalar_prefetch=0,
                grid=(n_row, n_k),
                in_specs=[
                    pl.BlockSpec((tm_eff, Dp), lambda i, k: (i, 0)),   # x tile
                    const_spec((1, Dp), lambda i, k: (0, 0)),          # gamma
                    const_spec((1, Dp), lambda i, k: (0, 0)),          # beta
                    pl.BlockSpec((Dp, th), lambda i, k: (0, k)),       # W1 tile
                    pl.BlockSpec((1, th), lambda i, k: (0, k)),        # b1 tile
                    pl.BlockSpec((th, Dp), lambda i, k: (k, 0)),       # W2 tile
                    const_spec((1, Dp), lambda i, k: (0, 0)),          # b2
                ],
                out_specs=pl.BlockSpec((tm_eff, Dp), lambda i, k: (i, 0)),
                scratch_shapes=[
                    pltpu.VMEM((tm_eff, Dp), self.compute_dtype),      # LN output
                    pltpu.VMEM((tm_eff, Dp), jnp.float32),             # fc2 acc
                ],
            )
            semantics = ("parallel", "arbitrary")

        return pl.pallas_call(
            kernel,
            out_shape=jax.ShapeDtypeStruct((Np, Dp), out_dtype),
            grid_spec=grid_spec,
            compiler_params=pltpu.CompilerParams(
                dimension_semantics=semantics,
                vmem_limit_bytes=self.budget,
            ),
        )

    def __call__(self, x):
        orig_shape = x.shape
        D = self.D
        assert orig_shape[-1] == D
        N = 1
        for s in orig_shape[:-1]:
            N *= int(s)

        tm_eff, Np, n_row = self._row_tiling(N)
        x2d = jnp.pad(x.reshape(N, D), ((0, Np - N), (0, self.Dp - D)))
        args = (x2d, self.gamma, self.beta, self.w1, self.b1, self.w2, self.b2)

        if self._try_single_buffer:
            try:
                out = self._build(tm_eff, Np, n_row, x.dtype, True)(*args)
            except Exception:
                # pipeline_mode / Buffered(1) not supported here: fall back.
                self._try_single_buffer = False
                out = self._build(tm_eff, Np, n_row, x.dtype, False)(*args)
        else:
            out = self._build(tm_eff, Np, n_row, x.dtype, False)(*args)

        return out[:N, :D].reshape(orig_shape)


def feed_forward_block(x, gamma, beta, w1, b1, w2, b2, *, tm=512, th=None,
                       compute_dtype=jnp.bfloat16):
    """One-off convenience wrapper (prefer PallasFeedForwardBlock for reuse so
    weight padding / casting happens once)."""
    return PallasFeedForwardBlock(gamma, beta, w1, b1, w2, b2, tm=tm, th=th,
                                  compute_dtype=compute_dtype)(x)


def _reference(x, gamma, beta, w1, b1, w2, b2):
    mean = jnp.mean(x, axis=-1, keepdims=True)
    var = jnp.mean((x - mean) ** 2, axis=-1, keepdims=True)
    xn = (x - mean) / jnp.sqrt(var + LN_EPS) * gamma + beta
    h = jnp.maximum(xn @ w1 + b1, 0.0)
    return h @ w2 + b2 + x


if __name__ == "__main__":
    key = jax.random.PRNGKey(0)

    def make_params(k, D, H):
        k1, k2, k3, k4 = jax.random.split(k, 4)
        gamma = jnp.ones((D,), jnp.float32)          # PyTorch LN init
        beta = jnp.zeros((D,), jnp.float32)
        w1 = jax.random.normal(k1, (D, H), jnp.float32) * (1.0 / math.sqrt(D))
        b1 = jax.random.normal(k2, (H,), jnp.float32) * 0.01
        w2 = jax.random.normal(k3, (H, D), jnp.float32) * (1.0 / math.sqrt(H))
        b2 = jax.random.normal(k4, (D,), jnp.float32) * 0.01
        return gamma, beta, w1, b1, w2, b2

    def check(out, x, params, name):
        ref = _reference(x, *params)
        assert out.shape == x.shape, name
        # bf16 matmul operands with f32 accumulation -> loose tolerance vs f32.
        assert jnp.allclose(out, ref, atol=5e-2, rtol=5e-2), f"mismatch: {name}"

    # Case 1: dim=64, mlp_ratio=4 -> hidden=256; S=7 exercises row padding.
    kx, kp, key = jax.random.split(key, 3)
    B, S, D = 2, 7, 64
    H = int(4.0 * D)
    params = make_params(kp, D, H)
    x = jax.random.normal(kx, (B, S, D), jnp.float32)
    ffn = PallasFeedForwardBlock(*params)             # resident-weight fast path
    out = jax.block_until_ready(ffn(x))
    check(out, x, params, "single_k small")

    # Reuse the same prepared (padded/cast) weights on a second token count:
    # exercises multi-row tiling and the >=2-row-tile (megacore) split.
    kx2, key = jax.random.split(key)
    x2 = jax.random.normal(kx2, (2, 33, D), jnp.float32)
    out2 = jax.block_until_ready(ffn(x2))
    check(out2, x2, params, "single_k reuse")

    # Case 2: force the hidden-reduction (multi-k, f32 accumulator) path.
    out3 = jax.block_until_ready(feed_forward_block(x, *params, th=128))
    check(out3, x, params, "multi_k")

    # Case 3: D not a multiple of 128 -> exercises LN column masking and
    # hidden-dim padding (D=48 -> Dp=128, H=192 -> Hp=256).
    kx3, kp3, key = jax.random.split(key, 3)
    D3 = 48
    H3 = int(4.0 * D3)
    params3 = make_params(kp3, D3, H3)
    x3 = jax.random.normal(kx3, (2, 9, D3), jnp.float32)
    out4 = jax.block_until_ready(feed_forward_block(x3, *params3))
    check(out4, x3, params3, "padded dims")

    print("KERNEL_OK")
</pallas_src>

<mosaic_0001>
module attributes {stable_mosaic.version = 11 : i64} {
  func.func @_ffn_kernel_single(%arg0: i32, %arg1: memref<16x128xf32, #tpu.memory_space<vmem>>, %arg2: memref<1x128xf32, #tpu.memory_space<vmem>>, %arg3: memref<1x128xf32, #tpu.memory_space<vmem>>, %arg4: memref<128x256xbf16, #tpu.memory_space<vmem>>, %arg5: memref<1x256xf32, #tpu.memory_space<vmem>>, %arg6: memref<256x128xbf16, #tpu.memory_space<vmem>>, %arg7: memref<1x128xf32, #tpu.memory_space<vmem>>, %arg8: memref<16x128xf32, #tpu.memory_space<vmem>>) attributes {dimension_semantics = [#tpu.dimension_semantics<parallel>], iteration_bounds = array<i64: 1>, scalar_prefetch = 0 : i64, scratch_operands = 0 : i64, tpu.core_type = #tpu.core_type<tc>, window_params = [{transform_indices = @transform_0, window_bounds = array<i64: 16, 128>}, {pipeline_mode = #tpu.pipeline_mode<synchronous>, transform_indices = @transform_1, window_bounds = array<i64: 1, 128>}, {pipeline_mode = #tpu.pipeline_mode<synchronous>, transform_indices = @transform_2, window_bounds = array<i64: 1, 128>}, {pipeline_mode = #tpu.pipeline_mode<synchronous>, transform_indices = @transform_3, window_bounds = array<i64: 128, 256>}, {pipeline_mode = #tpu.pipeline_mode<synchronous>, transform_indices = @transform_4, window_bounds = array<i64: 1, 256>}, {pipeline_mode = #tpu.pipeline_mode<synchronous>, transform_indices = @transform_5, window_bounds = array<i64: 256, 128>}, {pipeline_mode = #tpu.pipeline_mode<synchronous>, transform_indices = @transform_6, window_bounds = array<i64: 1, 128>}, {transform_indices = @transform_7, window_bounds = array<i64: 16, 128>}]} {
    %c0 = arith.constant 0 : index
    %c0_0 = arith.constant 0 : index
    %0 = vector.load %arg1[%c0, %c0_0] : memref<16x128xf32, #tpu.memory_space<vmem>>, vector<16x128xf32>
    %c0_1 = arith.constant 0 : index
    %c0_2 = arith.constant 0 : index
    %1 = vector.load %arg2[%c0_1, %c0_2] : memref<1x128xf32, #tpu.memory_space<vmem>>, vector<1x128xf32>
    %c0_3 = arith.constant 0 : index
    %c0_4 = arith.constant 0 : index
    %2 = vector.load %arg3[%c0_3, %c0_4] : memref<1x128xf32, #tpu.memory_space<vmem>>, vector<1x128xf32>
    %cst = arith.constant dense<0.000000e+00> : vector<16xf32>
    %3 = vector.multi_reduction <add>, %0, %cst [1] : vector<16x128xf32> to vector<16xf32>
    %4 = vector.shape_cast %3 : vector<16xf32> to vector<16x1xf32>
    %cst_5 = arith.constant 1.562500e-02 : f32
    %5 = vector.broadcast %cst_5 : f32 to vector<16x1xf32>
    %6 = arith.mulf %4, %5 : vector<16x1xf32>
    %7 = vector.broadcast %6 : vector<16x1xf32> to vector<16x128xf32>
    %8 = arith.subf %0, %7 : vector<16x128xf32>
    %9 = tpu.iota {dimensions = array<i32: 1>} : vector<1x128xi32>
    %c64_i32 = arith.constant 64 : i32
    %10 = vector.broadcast %c64_i32 : i32 to vector<1x128xi32>
    %11 = arith.cmpi slt, %9, %10 : vector<1x128xi32>
    %cst_6 = arith.constant 0.000000e+00 : f32
    %12 = vector.shape_cast %11 : vector<1x128xi1> to vector<1x128xi1>
    %13 = vector.broadcast %12 : vector<1x128xi1> to vector<16x128xi1>
    %14 = vector.broadcast %cst_6 : f32 to vector<16x128xf32>
    %15 = arith.select %13, %8, %14 : vector<16x128xi1>, vector<16x128xf32>
    %16 = arith.mulf %15, %15 : vector<16x128xf32>
    %cst_7 = arith.constant dense<0.000000e+00> : vector<16xf32>
    %17 = vector.multi_reduction <add>, %16, %cst_7 [1] : vector<16x128xf32> to vector<16xf32>
    %18 = vector.shape_cast %17 : vector<16xf32> to vector<16x1xf32>
    %cst_8 = arith.constant 1.562500e-02 : f32
    %19 = vector.broadcast %cst_8 : f32 to vector<16x1xf32>
    %20 = arith.mulf %18, %19 : vector<16x1xf32>
    %cst_9 = arith.constant 9.99999974E-6 : f32
    %21 = vector.broadcast %cst_9 : f32 to vector<16x1xf32>
    %22 = arith.addf %20, %21 : vector<16x1xf32>
    %23 = math.rsqrt %22 : vector<16x1xf32>
    %24 = vector.broadcast %23 : vector<16x1xf32> to vector<16x128xf32>
    %25 = arith.mulf %15, %24 : vector<16x128xf32>
    %26 = vector.broadcast %1 : vector<1x128xf32> to vector<16x128xf32>
    %27 = arith.mulf %25, %26 : vector<16x128xf32>
    %28 = vector.broadcast %2 : vector<1x128xf32> to vector<16x128xf32>
    %29 = arith.addf %27, %28 : vector<16x128xf32>
    %30 = arith.truncf %29 : vector<16x128xf32> to vector<16x128xbf16>
    %c0_10 = arith.constant 0 : index
    %c0_11 = arith.constant 0 : index
    %31 = vector.load %arg4[%c0_10, %c0_11] : memref<128x256xbf16, #tpu.memory_space<vmem>>, vector<128x256xbf16>
    %cst_12 = arith.constant dense<0.000000e+00> : vector<16x256xf32>
    %32 = tpu.matmul %30, %31, %cst_12 {dimension_numbers = #tpu.dot_dimension_numbers<[1], [0], [0], [1], [0, 0, 1, 1], [], []>} : vector<16x128xbf16>, vector<128x256xbf16>, vector<16x256xf32> -> vector<16x256xf32>
    %c0_13 = arith.constant 0 : index
    %c0_14 = arith.constant 0 : index
    %33 = vector.load %arg5[%c0_13, %c0_14] : memref<1x256xf32, #tpu.memory_space<vmem>>, vector<1x256xf32>
    %34 = vector.broadcast %33 : vector<1x256xf32> to vector<16x256xf32>
    %35 = arith.addf %32, %34 : vector<16x256xf32>
    %cst_15 = arith.constant 0.000000e+00 : f32
    %36 = vector.broadcast %cst_15 : f32 to vector<16x256xf32>
    %37 = arith.maximumf %35, %36 : vector<16x256xf32>
    %38 = arith.truncf %37 : vector<16x256xf32> to vector<16x256xbf16>
    %c0_16 = arith.constant 0 : index
    %c0_17 = arith.constant 0 : index
    %39 = vector.load %arg6[%c0_16, %c0_17] : memref<256x128xbf16, #tpu.memory_space<vmem>>, vector<256x128xbf16>
    %cst_18 = arith.constant dense<0.000000e+00> : vector<16x128xf32>
    %40 = tpu.matmul %38, %39, %cst_18 {dimension_numbers = #tpu.dot_dimension_numbers<[1], [0], [0], [1], [0, 0, 1, 1], [], []>} : vector<16x256xbf16>, vector<256x128xbf16>, vector<16x128xf32> -> vector<16x128xf32>
    %c0_19 = arith.constant 0 : index
    %c0_20 = arith.constant 0 : index
    %41 = vector.load %arg7[%c0_19, %c0_20] : memref<1x128xf32, #tpu.memory_space<vmem>>, vector<1x128xf32>
    %42 = vector.broadcast %41 : vector<1x128xf32> to vector<16x128xf32>
    %43 = arith.addf %40, %42 : vector<16x128xf32>
    %44 = arith.addf %43, %0 : vector<16x128xf32>
    %c0_21 = arith.constant 0 : index
    %c0_22 = arith.constant 0 : index
    %45 = vector.load %arg8[%c0_21, %c0_22] : memref<16x128xf32, #tpu.memory_space<vmem>>, vector<16x128xf32>
    tpu.vector_store %arg8[%c0_21, %c0_22], %44 {strides = array<i32>} : memref<16x128xf32, #tpu.memory_space<vmem>>, vector<16x128xf32>,
    return
  }
  func.func @transform_0(%arg0: i32) -> (i32, i32) {
    %c0_i32 = arith.constant 0 : i32
    %c0_i32_0 = arith.constant 0 : i32
    return %arg0, %c0_i32 : i32, i32
  }
  func.func @transform_1(%arg0: i32) -> (i32, i32) {
    %c0_i32 = arith.constant 0 : i32
    %c0_i32_0 = arith.constant 0 : i32
    %c0_i32_1 = arith.constant 0 : i32
    return %c0_i32, %c0_i32_0 : i32, i32
  }
  func.func @transform_2(%arg0: i32) -> (i32, i32) {
    %c0_i32 = arith.constant 0 : i32
    %c0_i32_0 = arith.constant 0 : i32
    %c0_i32_1 = arith.constant 0 : i32
    return %c0_i32, %c0_i32_0 : i32, i32
  }
  func.func @transform_3(%arg0: i32) -> (i32, i32) {
    %c0_i32 = arith.constant 0 : i32
    %c0_i32_0 = arith.constant 0 : i32
    %c0_i32_1 = arith.constant 0 : i32
    return %c0_i32, %c0_i32_0 : i32, i32
  }
  func.func @transform_4(%arg0: i32) -> (i32, i32) {
    %c0_i32 = arith.constant 0 : i32
    %c0_i32_0 = arith.constant 0 : i32
    %c0_i32_1 = arith.constant 0 : i32
    return %c0_i32, %c0_i32_0 : i32, i32
  }
  func.func @transform_5(%arg0: i32) -> (i32, i32) {
    %c0_i32 = arith.constant 0 : i32
    %c0_i32_0 = arith.constant 0 : i32
    %c0_i32_1 = arith.constant 0 : i32
    return %c0_i32, %c0_i32_0 : i32, i32
  }
  func.func @transform_6(%arg0: i32) -> (i32, i32) {
    %c0_i32 = arith.constant 0 : i32
    %c0_i32_0 = arith.constant 0 : i32
    %c0_i32_1 = arith.constant 0 : i32
    return %c0_i32, %c0_i32_0 : i32, i32
  }
  func.func @transform_7(%arg0: i32) -> (i32, i32) {
    %c0_i32 = arith.constant 0 : i32
    %c0_i32_0 = arith.constant 0 : i32
    return %arg0, %c0_i32 : i32, i32
  }
}

module attributes {stable_mosaic.version = 11 : i64} {
  func.func @_ffn_kernel_single(%arg0: i32, %arg1: memref<16x128xf32, #tpu.memory_space<vmem>>, %arg2: memref<1x128xf32, #tpu.memory_space<vmem>>, %arg3: memref<1x128xf32, #tpu.memory_space<vmem>>, %arg4: memref<128x256xbf16, #tpu.memory_space<vmem>>, %arg5: memref<1x256xf32, #tpu.memory_space<vmem>>, %arg6: memref<256x128xbf16, #tpu.memory_space<vmem>>, %arg7: memref<1x128xf32, #tpu.memory_space<vmem>>, %arg8: memref<16x128xf32, #tpu.memory_space<vmem>>) attributes {dimension_semantics = [#tpu.dimension_semantics<parallel>], iteration_bounds = array<i64: 1>, scalar_prefetch = 0 : i64, scratch_operands = 0 : i64, tpu.core_type = #tpu.core_type<tc>, window_params = [{transform_indices = @transform_0, window_bounds = array<i64: 16, 128>}, {pipeline_mode = #tpu.pipeline_mode<synchronous>, transform_indices = @transform_1, window_bounds = array<i64: 1, 128>}, {pipeline_mode = #tpu.pipeline_mode<synchronous>, transform_indices = @transform_2, window_bounds = array<i64: 1, 128>}, {pipeline_mode = #tpu.pipeline_mode<synchronous>, transform_indices = @transform_3, window_bounds = array<i64: 128, 256>}, {pipeline_mode = #tpu.pipeline_mode<synchronous>, transform_indices = @transform_4, window_bounds = array<i64: 1, 256>}, {pipeline_mode = #tpu.pipeline_mode<synchronous>, transform_indices = @transform_5, window_bounds = array<i64: 256, 128>}, {pipeline_mode = #tpu.pipeline_mode<synchronous>, transform_indices = @transform_6, window_bounds = array<i64: 1, 128>}, {transform_indices = @transform_7, window_bounds = array<i64: 16, 128>}]} {
    %c0 = arith.constant 0 : index
    %c0_0 = arith.constant 0 : index
    %0 = vector.load %arg1[%c0, %c0_0] : memref<16x128xf32, #tpu.memory_space<vmem>>, vector<16x128xf32>
    %c0_1 = arith.constant 0 : index
    %c0_2 = arith.constant 0 : index
    %1 = vector.load %arg2[%c0_1, %c0_2] : memref<1x128xf32, #tpu.memory_space<vmem>>, vector<1x128xf32>
    %c0_3 = arith.constant 0 : index
    %c0_4 = arith.constant 0 : index
    %2 = vector.load %arg3[%c0_3, %c0_4] : memref<1x128xf32, #tpu.memory_space<vmem>>, vector<1x128xf32>
    %cst = arith.constant dense<0.000000e+00> : vector<16xf32>
    %3 = vector.multi_reduction <add>, %0, %cst [1] : vector<16x128xf32> to vector<16xf32>
    %4 = vector.shape_cast %3 : vector<16xf32> to vector<16x1xf32>
    %cst_5 = arith.constant 1.562500e-02 : f32
    %5 = vector.broadcast %cst_5 : f32 to vector<16x1xf32>
    %6 = arith.mulf %4, %5 : vector<16x1xf32>
    %7 = vector.broadcast %6 : vector<16x1xf32> to vector<16x128xf32>
    %8 = arith.subf %0, %7 : vector<16x128xf32>
    %9 = tpu.iota {dimensions = array<i32: 1>} : vector<1x128xi32>
    %c64_i32 = arith.constant 64 : i32
    %10 = vector.broadcast %c64_i32 : i32 to vector<1x128xi32>
    %11 = arith.cmpi slt, %9, %10 : vector<1x128xi32>
    %cst_6 = arith.constant 0.000000e+00 : f32
    %12 = vector.shape_cast %11 : vector<1x128xi1> to vector<1x128xi1>
    %13 = vector.broadcast %12 : vector<1x128xi1> to vector<16x128xi1>
    %14 = vector.broadcast %cst_6 : f32 to vector<16x128xf32>
    %15 = arith.select %13, %8, %14 : vector<16x128xi1>, vector<16x128xf32>
    %16 = arith.mulf %15, %15 : vector<16x128xf32>
    %cst_7 = arith.constant dense<0.000000e+00> : vector<16xf32>
    %17 = vector.multi_reduction <add>, %16, %cst_7 [1] : vector<16x128xf32> to vector<16xf32>
    %18 = vector.shape_cast %17 : vector<16xf32> to vector<16x1xf32>
    %cst_8 = arith.constant 1.562500e-02 : f32
    %19 = vector.broadcast %cst_8 : f32 to vector<16x1xf32>
    %20 = arith.mulf %18, %19 : vector<16x1xf32>
    %cst_9 = arith.constant 9.99999974E-6 : f32
    %21 = vector.broadcast %cst_9 : f32 to vector<16x1xf32>
    %22 = arith.addf %20, %21 : vector<16x1xf32>
    %23 = math.rsqrt %22 : vector<16x1xf32>
    %24 = vector.broadcast %23 : vector<16x1xf32> to vector<16x128xf32>
    %25 = arith.mulf %15, %24 : vector<16x128xf32>
    %26 = vector.broadcast %1 : vector<1x128xf32> to vector<16x128xf32>
    %27 = arith.mulf %25, %26 : vector<16x128xf32>
    %28 = vector.broadcast %2 : vector<1x128xf32> to vector<16x128xf32>
    %29 = arith.addf %27, %28 : vector<16x128xf32>
    %30 = arith.truncf %29 : vector<16x128xf32> to vector<16x128xbf16>
    %c0_10 = arith.constant 0 : index
    %c0_11 = arith.constant 0 : index
    %31 = vector.load %arg4[%c0_10, %c0_11] : memref<128x256xbf16, #tpu.memory_space<vmem>>, vector<128x256xbf16>
    %cst_12 = arith.constant dense<0.000000e+00> : vector<16x256xf32>
    %32 = tpu.matmul %30, %31, %cst_12 {dimension_numbers = #tpu.dot_dimension_numbers<[1], [0], [0], [1], [0, 0, 1, 1], [], []>} : vector<16x128xbf16>, vector<128x256xbf16>, vector<16x256xf32> -> vector<16x256xf32>
    %c0_13 = arith.constant 0 : index
    %c0_14 = arith.constant 0 : index
    %33 = vector.load %arg5[%c0_13, %c0_14] : memref<1x256xf32, #tpu.memory_space<vmem>>, vector<1x256xf32>
    %34 = vector.broadcast %33 : vector<1x256xf32> to vector<16x256xf32>
    %35 = arith.addf %32, %34 : vector<16x256xf32>
    %cst_15 = arith.constant 0.000000e+00 : f32
    %36 = vector.broadcast %cst_15 : f32 to vector<16x256xf32>
    %37 = arith.maximumf %35, %36 : vector<16x256xf32>
    %38 = arith.truncf %37 : vector<16x256xf32> to vector<16x256xbf16>
    %c0_16 = arith.constant 0 : index
    %c0_17 = arith.constant 0 : index
    %39 = vector.load %arg6[%c0_16, %c0_17] : memref<256x128xbf16, #tpu.memory_space<vmem>>, vector<256x128xbf16>
    %cst_18 = arith.constant dense<0.000000e+00> : vector<16x128xf32>
    %40 = tpu.matmul %38, %39, %cst_18 {dimension_numbers = #tpu.dot_dimension_numbers<[1], [0], [0], [1], [0, 0, 1, 1], [], []>} : vector<16x256xbf16>, vector<256x128xbf16>, vector<16x128xf32> -> vector<16x128xf32>
    %c0_19 = arith.constant 0 : index
    %c0_20 = arith.constant 0 : index
    %41 = vector.load %arg7[%c0_19, %c0_20] : memref<1x128xf32, #tpu.memory_space<vmem>>, vector<1x128xf32>
    %42 = vector.broadcast %41 : vector<1x128xf32> to vector<16x128xf32>
    %43 = arith.addf %40, %42 : vector<16x128xf32>
    %44 = arith.addf %43, %0 : vector<16x128xf32>
    %c0_21 = arith.constant 0 : index
    %c0_22 = arith.constant 0 : index
    %45 = vector.load %arg8[%c0_21, %c0_22] : memref<16x128xf32, #tpu.memory_space<vmem>>, vector<16x128xf32>
    tpu.vector_store %arg8[%c0_21, %c0_22], %44 {strides = array<i32>} : memref<16x128xf32, #tpu.memory_space<vmem>>, vector<16x128xf32>,
    return
  }
  func.func @transform_0(%arg0: i32) -> (i32, i32) {
    %c0_i32 = arith.constant 0 : i32
    %c0_i32_0 = arith.constant 0 : i32
    return %arg0, %c0_i32 : i32, i32
  }
  func.func @transform_1(%arg0: i32) -> (i32, i32) {
    %c0_i32 = arith.constant 0 : i32
    %c0_i32_0 = arith.constant 0 : i32
    %c0_i32_1 = arith.constant 0 : i32
    return %c0_i32, %c0_i32_0 : i32, i32
  }
  func.func @transform_2(%arg0: i32) -> (i32, i32) {
    %c0_i32 = arith.constant 0 : i32
    %c0_i32_0 = arith.constant 0 : i32
    %c0_i32_1 = arith.constant 0 : i32
    return %c0_i32, %c0_i32_0 : i32, i32
  }
  func.func @transform_3(%arg0: i32) -> (i32, i32) {
    %c0_i32 = arith.constant 0 : i32
    %c0_i32_0 = arith.constant 0 : i32
    %c0_i32_1 = arith.constant 0 : i32
    return %c0_i32, %c0_i32_0 : i32, i32
  }
  func.func @transform_4(%arg0: i32) -> (i32, i32) {
    %c0_i32 = arith.constant 0 : i32
    %c0_i32_0 = arith.constant 0 : i32
    %c0_i32_1 = arith.constant 0 : i32
    return %c0_i32, %c0_i32_0 : i32, i32
  }
  func.func @transform_5(%arg0: i32) -> (i32, i32) {
    %c0_i32 = arith.constant 0 : i32
    %c0_i32_0 = arith.constant 0 : i32
    %c0_i32_1 = arith.constant 0 : i32
    return %c0_i32, %c0_i32_0 : i32, i32
  }
  func.func @transform_6(%arg0: i32) -> (i32, i32) {
    %c0_i32 = arith.constant 0 : i32
    %c0_i32_0 = arith.constant 0 : i32
    %c0_i32_1 = arith.constant 0 : i32
    return %c0_i32, %c0_i32_0 : i32, i32
  }
  func.func @transform_7(%arg0: i32) -> (i32, i32) {
    %c0_i32 = arith.constant 0 : i32
    %c0_i32_0 = arith.constant 0 : i32
    return %arg0, %c0_i32 : i32, i32
  }
}

</mosaic_0001>

<llo_original>
// kernel: tpu_custom_call.1
$region0: #{tpu_custom_call.1}
  #allocation0 [shape = 'u32[]', space=smem, size = 0x4, offset = 0x4, fixed_abs, tag = 'smem constant byte address 0x4 - core index']
  #allocation1 [shape = 'u32[144,128]{1,0:T(1,128)}', space=vmem, size = 0x12000, scoped, tag = 'internal scratch']
  %s0 = inlined_call_operand.hbm [shape: f32[16,128], index: 0, kind: input, shape index: {}]
  %s1 = inlined_call_operand.vmem [shape: f32[1,128], index: 1, kind: input, shape index: {}]
  %s2 = inlined_call_operand.vmem [shape: f32[1,128], index: 2, kind: input, shape index: {}]
  %s3 = inlined_call_operand.hbm [shape: bf16[128,256], index: 3, kind: input, shape index: {}]
  %s4 = inlined_call_operand.vmem [shape: f32[1,256], index: 4, kind: input, shape index: {}]
  %s5 = inlined_call_operand.hbm [shape: bf16[256,128], index: 5, kind: input, shape index: {}]
  %s6 = inlined_call_operand.vmem [shape: f32[1,128], index: 6, kind: input, shape index: {}]
  %s7 = inlined_call_operand.hbm [shape: f32[16,128], index: 7, kind: output, shape index: {}]
  %s8 = sld [smem:[#allocation0]]
  $region50: #{tpu_custom_call.1} parent=0
    _
  %s10 = ssub.s32 1, %s8
  %s11 = scalar_select 0, %s10, %s8
  $region1: #{tpu_custom_call.1} parent=0
    #allocation2 [shape = 'u8[8192]{0}', space=vmem, size = 0x2000, scoped, tag = 'input window, operand 0, single buffered']
    #allocation3 [shape = 's32[1]{0}', space=sflag, size = 0x4, scoped, tag = 'scoped memory for tpu_custom_call.1']
    #allocation4 [shape = 's32[1]{0}', space=sflag, size = 0x4, scoped, tag = 'scoped memory for tpu_custom_call.1']
    #allocation5 [shape = 'u8[65536]{0}', space=vmem, size = 0x10000, scoped, tag = 'input window, operand 3, single buffered']
    #allocation6 [shape = 's32[1]{0}', space=sflag, size = 0x4, scoped, tag = 'scoped memory for tpu_custom_call.1']
    #allocation7 [shape = 'u8[65536]{0}', space=vmem, size = 0x10000, scoped, tag = 'input window, operand 5, single buffered']
    #allocation8 [shape = 'u8[8192]{0}', space=vmem, size = 0x2000, scoped, tag = 'output window, operand 0, single buffered']
    %12 = vsyncpa [#allocation3], 0
    %13 = vsyncpa [#allocation6], 0
    %14 = vsyncpa [#allocation4], 0
    // Predicated region
    $region2: #{tpu_custom_call.1} parent=1 // pred_check
      _
    $region3: #{tpu_custom_call.1} parent=1 // pred_check_branch
      %16 = sbr.rel (0) target = $region5
    $region4: #{tpu_custom_call.1} parent=1 // pred_region
      %s18 = ssub.s32 256, 256
      %19 = vsyncadd [#allocation3], %s18
      %s20 = sshll.u32 [#allocation2], 4
      %s21 = int_to_ptr.vmem [resolvable:$true] %s20
      %26 = dma.hbm_to_vmem [thread:$0]  %s0, 256, %s21, [#allocation3], 128, 128, 8
    $region5: #{tpu_custom_call.1} parent=1 // pred_fallthru
      _
    // Predicated region
    $region6: #{tpu_custom_call.1} parent=1 // pred_check
      _
    $region7: #{tpu_custom_call.1} parent=1 // pred_check_branch
      %28 = sbr.rel (0) target = $region9
    $region8: #{tpu_custom_call.1} parent=1 // pred_region
      _
    $region9: #{tpu_custom_call.1} parent=1 // pred_fallthru
      _
    // Predicated region
    $region10: #{tpu_custom_call.1} parent=1 // pred_check
      _
    $region11: #{tpu_custom_call.1} parent=1 // pred_check_branch
      %30 = sbr.rel (0) target = $region13
    $region12: #{tpu_custom_call.1} parent=1 // pred_region
      _
    $region13: #{tpu_custom_call.1} parent=1 // pred_fallthru
      _
    // Predicated region
    $region14: #{tpu_custom_call.1} parent=1 // pred_check
      _
    $region15: #{tpu_custom_call.1} parent=1 // pred_check_branch
      %32 = sbr.rel (0) target = $region17
    $region16: #{tpu_custom_call.1} parent=1 // pred_region
      %s34 = ssub.s32 2048, 2048
      %35 = vsyncadd [#allocation6], %s34
      %s36 = sshll.u32 [#allocation5], 4
      %s37 = int_to_ptr.vmem [resolvable:$true] %s36
      %42 = dma.hbm_to_vmem [thread:$0]  %s3, 2048, %s37, [#allocation6], 128, 128, 8
    $region17: #{tpu_custom_call.1} parent=1 // pred_fallthru
      _
    // Predicated region
    $region18: #{tpu_custom_call.1} parent=1 // pred_check
      _
    $region19: #{tpu_custom_call.1} parent=1 // pred_check_branch
      %44 = sbr.rel (0) target = $region21
    $region20: #{tpu_custom_call.1} parent=1 // pred_region
      _
    $region21: #{tpu_custom_call.1} parent=1 // pred_fallthru
      _
    // Predicated region
    $region22: #{tpu_custom_call.1} parent=1 // pred_check
      _
    $region23: #{tpu_custom_call.1} parent=1 // pred_check_branch
      %46 = sbr.rel (0) target = $region25
    $region24: #{tpu_custom_call.1} parent=1 // pred_region
      %s48 = ssub.s32 2048, 2048
      %49 = vsyncadd [#allocation6], %s48
      %s50 = sshll.u32 [#allocation7], 4
      %s51 = int_to_ptr.vmem [resolvable:$true] %s50
      %56 = dma.hbm_to_vmem [thread:$0]  %s5, 2048, %s51, [#allocation6], 64, 64, 4
    $region25: #{tpu_custom_call.1} parent=1 // pred_fallthru
      _
    // Predicated region
    $region26: #{tpu_custom_call.1} parent=1 // pred_check
      _
    $region27: #{tpu_custom_call.1} parent=1 // pred_check_branch
      %58 = sbr.rel (0) target = $region29
    $region28: #{tpu_custom_call.1} parent=1 // pred_region
      _
    $region29: #{tpu_custom_call.1} parent=1 // pred_fallthru
      _
    // Predicated region
    $region30: #{tpu_custom_call.1} parent=1 // pred_check
      _
    $region31: #{tpu_custom_call.1} parent=1 // pred_check_branch
      %60 = sbr.rel (0) target = $region33
    $region32: #{tpu_custom_call.1} parent=1 // pred_region
      %61 = dma.done [#allocation3], 256
    $region33: #{tpu_custom_call.1} parent=1 // pred_fallthru
      _
    // Predicated region
    $region34: #{tpu_custom_call.1} parent=1 // pred_check
      _
    $region35: #{tpu_custom_call.1} parent=1 // pred_check_branch
      %63 = sbr.rel (0) target = $region37
    $region36: #{tpu_custom_call.1} parent=1 // pred_region
      %64 = dma.done [#allocation6], 2048
    $region37: #{tpu_custom_call.1} parent=1 // pred_fallthru
      _
    // Predicated region
    $region38: #{tpu_custom_call.1} parent=1 // pred_check
      _
    $region39: #{tpu_custom_call.1} parent=1 // pred_check_branch
      %66 = sbr.rel (0) target = $region41
    $region40: #{tpu_custom_call.1} parent=1 // pred_region
      %67 = dma.done [#allocation6], 2048
    $region41: #{tpu_custom_call.1} parent=1 // pred_fallthru
      _
    %v69 = vld [vmem:[#allocation2] sm:$0xff]
    %v70 = vld [vmem:[#allocation2 + $0x8] sm:$0xff]
    %v71 = vld [vmem:[%s1] sm:$0x1]
    %v72 = vld [vmem:[%s2] sm:$0x1]
    %73 = vadd.xlane.f32.xlu0 %v69
    %v74 = vpop.xlane.xlu0 %73
    %75 = vadd.xlane.f32.xlu0 %v70
    %v76 = vpop.xlane.xlu0 %75
    %v77 = vmul.f32 %v74, 0.015625
    %v78 = vmul.f32 %v76, 0.015625
    %v79 = vsub.f32 %v69, %v77
    %v80 = vsub.f32 %v70, %v78
    %v81 = vlaneseq
    %v82 = vand.u32 %v81, 127
    %vm83 = vcmp.lt.s32.totalorder %v82, 64
    %v84 = vsel %vm83, 1, 0
    %vm85 = vcmp.eq.s32.totalorder %v84, 1
    %v86 = vsel %vm85, %v79, 0.0
    %v87 = vsel %vm85, %v80, 0.0
    %v88 = vmul.f32 %v86, %v86
    %v89 = vmul.f32 %v87, %v87
    %90 = vadd.xlane.f32.xlu0 %v88
    %v91 = vpop.xlane.xlu0 %90
    %92 = vadd.xlane.f32.xlu0 %v89
    %v93 = vpop.xlane.xlu0 %92
    %v94 = vmul.f32 %v91, 0.015625
    %v95 = vmul.f32 %v93, 0.015625
    %v96 = vadd.f32 %v94, 1e-05
    %v97 = vadd.f32 %v95, 1e-05
    %v98 = vrsqrt.pop %v96
    %v99 = vrsqrt.pop %v97
    %v100 = vmul.f32 %v86, %v98
    %v101 = vmul.f32 %v87, %v99
    %v103 = vlaneseq
    %v104 = vshrl.u32 %v103, 7
    %v105 = vsub.s32 0, %v104
    %v106 = vrot.slane %v71, %v105
    %v108 = vmul.f32 %v100, %v106
    %v109 = vmul.f32 %v101, %v106
    %v111 = vlaneseq
    %v112 = vshrl.u32 %v111, 7
    %v113 = vsub.s32 0, %v112
    %v114 = vrot.slane %v72, %v113
    %v116 = vadd.f32 %v108, %v114
    %v117 = vadd.f32 %v109, %v114
    %v118 = vpack.c.bf16 %v117, %v116
    %v119 = vld [vmem:[#allocation5] sm:$0xff]
    %v120 = vld [vmem:[#allocation5 + $0x8] sm:$0xff]
    %v121 = vld [vmem:[#allocation5 + $0x10] sm:$0xff]
    %v122 = vld [vmem:[#allocation5 + $0x18] sm:$0xff]
    %v123 = vld [vmem:[#allocation5 + $0x20] sm:$0xff]
    %v124 = vld [vmem:[#allocation5 + $0x28] sm:$0xff]
    %v125 = vld [vmem:[#allocation5 + $0x30] sm:$0xff]
    %v126 = vld [vmem:[#allocation5 + $0x38] sm:$0xff]
    %v127 = vld [vmem:[#allocation5 + $0x40] sm:$0xff]
    %v128 = vld [vmem:[#allocation5 + $0x48] sm:$0xff]
    %v129 = vld [vmem:[#allocation5 + $0x50] sm:$0xff]
    %v130 = vld [vmem:[#allocation5 + $0x58] sm:$0xff]
    %v131 = vld [vmem:[#allocation5 + $0x60] sm:$0xff]
    %v132 = vld [vmem:[#allocation5 + $0x68] sm:$0xff]
    %v133 = vld [vmem:[#allocation5 + $0x70] sm:$0xff]
    %v134 = vld [vmem:[#allocation5 + $0x78] sm:$0xff]
    %v135 = vld [vmem:[%s4] sm:$0x3]
    %v137 = vlaneseq
    %v138 = vshrl.u32 %v137, 7
    %v139 = vsub.s32 0, %v138
    %v140 = vrot.slane %v135, %v139
    %v141 = vlaneseq
    %v142 = vshrl.u32 %v141, 7
    %v143 = vsub.s32 1, %v142
    %v144 = vrot.slane %v135, %v143
    %v163 = vunpack.c.l.b16 %v119
    %v164 = vunpack.c.h.b16 %v119
    %v165 = vunpack.c.l.b16 %v120
    %v166 = vunpack.c.h.b16 %v120
    %v167 = vunpack.c.l.b16 %v121
    %v168 = vunpack.c.h.b16 %v121
    %v169 = vunpack.c.l.b16 %v122
    %v170 = vunpack.c.h.b16 %v122
    %v171 = vunpack.c.l.b16 %v123
    %v172 = vunpack.c.h.b16 %v123
    %v173 = vunpack.c.l.b16 %v124
    %v174 = vunpack.c.h.b16 %v124
    %v175 = vunpack.c.l.b16 %v125
    %v176 = vunpack.c.h.b16 %v125
    %v177 = vunpack.c.l.b16 %v126
    %v178 = vunpack.c.h.b16 %v126
    %v179 = vunpack.c.l.b16 %v127
    %v180 = vunpack.c.h.b16 %v127
    %v181 = vunpack.c.l.b16 %v128
    %v182 = vunpack.c.h.b16 %v128
    %v183 = vunpack.c.l.b16 %v129
    %v184 = vunpack.c.h.b16 %v129
    %v185 = vunpack.c.l.b16 %v130
    %v186 = vunpack.c.h.b16 %v130
    %v187 = vunpack.c.l.b16 %v131
    %v188 = vunpack.c.h.b16 %v131
    %v189 = vunpack.c.l.b16 %v132
    %v190 = vunpack.c.h.b16 %v132
    %v191 = vunpack.c.l.b16 %v133
    %v192 = vunpack.c.h.b16 %v133
    %v193 = vunpack.c.l.b16 %v134
    %v194 = vunpack.c.h.b16 %v134
    %v195 = vpack.c.b16 %v165, %v163
    %v196 = vpack.c.b16 %v166, %v164
    %v197 = vpack.c.b16 %v169, %v167
    %v198 = vpack.c.b16 %v170, %v168
    %v199 = vpack.c.b16 %v173, %v171
    %v200 = vpack.c.b16 %v174, %v172
    %v201 = vpack.c.b16 %v177, %v175
    %v202 = vpack.c.b16 %v178, %v176
    %v203 = vpack.c.b16 %v181, %v179
    %v204 = vpack.c.b16 %v182, %v180
    %v205 = vpack.c.b16 %v185, %v183
    %v206 = vpack.c.b16 %v186, %v184
    %v207 = vpack.c.b16 %v189, %v187
    %v208 = vpack.c.b16 %v190, %v188
    %v209 = vpack.c.b16 %v193, %v191
    %v210 = vpack.c.b16 %v194, %v192
    %227 = vmatprep.subr.bf16.mxu0 %v196
    %228 = vmatpush1.bf16.msra.mxu0 %v195
    %229 = vmatprep.subr.bf16.mxu0 %v198
    %230 = vmatpush1.bf16.msra.mxu0 %v197
    %231 = vmatprep.subr.bf16.mxu0 %v200
    %232 = vmatpush1.bf16.msra.mxu0 %v199
    %233 = vmatprep.subr.bf16.mxu0 %v202
    %234 = vmatpush1.bf16.msra.mxu0 %v201
    %235 = vmatprep.subr.bf16.mxu0 %v204
    %236 = vmatpush1.bf16.msra.mxu0 %v203
    %237 = vmatprep.subr.bf16.mxu0 %v206
    %238 = vmatpush1.bf16.msra.mxu0 %v205
    %239 = vmatprep.subr.bf16.mxu0 %v208
    %240 = vmatpush1.bf16.msra.mxu0 %v207
    %241 = vmatprep.subr.bf16.mxu0 %v210
    %242 = vmatpush1.bf16.msra.mxu0 %v209
    %243 = vmatprep.subr.bf16.mxu0 0
    %244 = vmatpush1.bf16.msra.mxu0 0
    %245 = vmatprep.subr.bf16.mxu0 0
    %246 = vmatpush1.bf16.msra.mxu0 0
    %247 = vmatprep.subr.bf16.mxu0 0
    %248 = vmatpush1.bf16.msra.mxu0 0
    %249 = vmatprep.subr.bf16.mxu0 0
    %250 = vmatpush1.bf16.msra.mxu0 0
    %251 = vmatprep.subr.bf16.mxu0 0
    %252 = vmatpush1.bf16.msra.mxu0 0
    %253 = vmatprep.subr.bf16.mxu0 0
    %254 = vmatpush1.bf16.msra.mxu0 0
    %255 = vmatprep.subr.bf16.mxu0 0
    %256 = vmatpush1.bf16.msra.mxu0 0
    %257 = vmatprep.subr.bf16.mxu0 0
    %258 = vmatpush1.bf16.msra.mxu0 0
    %259 = vmatprep.mubr.bf16.mxu0 0
    %260 = vmatmul.mubr.bf16.gmra.mrb[0].mxu0 %v118
    %v261 = vpop.f32.mrb[0].mxu0
    %v262 = vadd.f32 %v140, %v261
    %v263 = vpop.f32.mrb[0].mxu0
    %v264 = vadd.f32 %v144, %v263
    %v265 = vpop.f32.mrb[0].mxu0
    %v266 = vadd.f32 %v140, %v265
    %v267 = vpop.f32.mrb[0].mxu0
    %v268 = vadd.f32 %v144, %v267
    %269 = vdwg.mxu0
    %v270 = vmax.f32 %v262, 0.0
    %v271 = vmax.f32 %v264, 0.0
    %v272 = vmax.f32 %v266, 0.0
    %v273 = vmax.f32 %v268, 0.0
    %v274 = vpack.c.bf16 %v272, %v270
    %v275 = vpack.c.bf16 %v273, %v271
    %v276 = vld [vmem:[#allocation7] sm:$0xf]
    %v277 = vld [vmem:[#allocation7 + $0x4] sm:$0xf]
    %v278 = vld [vmem:[#allocation7 + $0x8] sm:$0xf]
    %v279 = vld [vmem:[#allocation7 + $0xc] sm:$0xf]
    %v280 = vld [vmem:[#allocation7 + $0x10] sm:$0xf]
    %v281 = vld [vmem:[#allocation7 + $0x14] sm:$0xf]
    %v282 = vld [vmem:[#allocation7 + $0x18] sm:$0xf]
    %v283 = vld [vmem:[#allocation7 + $0x1c] sm:$0xf]
    %v284 = vld [vmem:[#allocation7 + $0x20] sm:$0xf]
    %v285 = vld [vmem:[#allocation7 + $0x24] sm:$0xf]
    %v286 = vld [vmem:[#allocation7 + $0x28] sm:$0xf]
    %v287 = vld [vmem:[#allocation7 + $0x2c] sm:$0xf]
    %v288 = vld [vmem:[#allocation7 + $0x30] sm:$0xf]
    %v289 = vld [vmem:[#allocation7 + $0x34] sm:$0xf]
    %v290 = vld [vmem:[#allocation7 + $0x38] sm:$0xf]
    %v291 = vld [vmem:[#allocation7 + $0x3c] sm:$0xf]
    %v292 = vld [vmem:[#allocation7 + $0x40] sm:$0xf]
    %v293 = vld [vmem:[#allocation7 + $0x44] sm:$0xf]
    %v294 = vld [vmem:[#allocation7 + $0x48] sm:$0xf]
    %v295 = vld [vmem:[#allocation7 + $0x4c] sm:$0xf]
    %v296 = vld [vmem:[#allocation7 + $0x50] sm:$0xf]
    %v297 = vld [vmem:[#allocation7 + $0x54] sm:$0xf]
    %v298 = vld [vmem:[#allocation7 + $0x58] sm:$0xf]
    %v299 = vld [vmem:[#allocation7 + $0x5c] sm:$0xf]
    %v300 = vld [vmem:[#allocation7 + $0x60] sm:$0xf]
    %v301 = vld [vmem:[#allocation7 + $0x64] sm:$0xf]
    %v302 = vld [vmem:[#allocation7 + $0x68] sm:$0xf]
    %v303 = vld [vmem:[#allocation7 + $0x6c] sm:$0xf]
    %v304 = vld [vmem:[#allocation7 + $0x70] sm:$0xf]
    %v305 = vld [vmem:[#allocation7 + $0x74] sm:$0xf]
    %v306 = vld [vmem:[#allocation7 + $0x78] sm:$0xf]
    %v307 = vld [vmem:[#allocation7 + $0x7c] sm:$0xf]
    %v308 = vld [vmem:[%s6] sm:$0x1]
    %v310 = vlaneseq
    %v311 = vshrl.u32 %v310, 7
    %v312 = vsub.s32 0, %v311
    %v313 = vrot.slane %v308, %v312
    %v347 = vunpack.c.l.b16 %v276
    %v348 = vunpack.c.l.b16 %v277
    %v349 = vunpack.c.l.b16 %v278
    %v350 = vunpack.c.l.b16 %v279
    %v351 = vunpack.c.l.b16 %v280
    %v352 = vunpack.c.l.b16 %v281
    %v353 = vunpack.c.l.b16 %v282
    %v354 = vunpack.c.l.b16 %v283
    %v355 = vunpack.c.l.b16 %v284
    %v356 = vunpack.c.l.b16 %v285
    %v357 = vunpack.c.l.b16 %v286
    %v358 = vunpack.c.l.b16 %v287
    %v359 = vunpack.c.l.b16 %v288
    %v360 = vunpack.c.l.b16 %v289
    %v361 = vunpack.c.l.b16 %v290
    %v362 = vunpack.c.l.b16 %v291
    %v363 = vunpack.c.l.b16 %v292
    %v364 = vunpack.c.l.b16 %v293
    %v365 = vunpack.c.l.b16 %v294
    %v366 = vunpack.c.l.b16 %v295
    %v367 = vunpack.c.l.b16 %v296
    %v368 = vunpack.c.l.b16 %v297
    %v369 = vunpack.c.l.b16 %v298
    %v370 = vunpack.c.l.b16 %v299
    %v371 = vunpack.c.l.b16 %v300
    %v372 = vunpack.c.l.b16 %v301
    %v373 = vunpack.c.l.b16 %v302
    %v374 = vunpack.c.l.b16 %v303
    %v375 = vunpack.c.l.b16 %v304
    %v376 = vunpack.c.l.b16 %v305
    %v377 = vunpack.c.l.b16 %v306
    %v378 = vunpack.c.l.b16 %v307
    %v379 = vpack.c.b16 %v348, %v347
    %v380 = vpack.c.b16 %v350, %v349
    %v381 = vpack.c.b16 %v352, %v351
    %v382 = vpack.c.b16 %v354, %v353
    %v383 = vpack.c.b16 %v356, %v355
    %v384 = vpack.c.b16 %v358, %v357
    %v385 = vpack.c.b16 %v360, %v359
    %v386 = vpack.c.b16 %v362, %v361
    %v387 = vpack.c.b16 %v364, %v363
    %v388 = vpack.c.b16 %v366, %v365
    %v389 = vpack.c.b16 %v368, %v367
    %v390 = vpack.c.b16 %v370, %v369
    %v391 = vpack.c.b16 %v372, %v371
    %v392 = vpack.c.b16 %v374, %v373
    %v393 = vpack.c.b16 %v376, %v375
    %v394 = vpack.c.b16 %v378, %v377
    %411 = vmatprep.subr.bf16.mxu0 0
    %412 = vmatpush1.bf16.msra.mxu0 %v379
    %413 = vmatprep.subr.bf16.mxu0 0
    %414 = vmatpush1.bf16.msra.mxu0 %v380
    %415 = vmatprep.subr.bf16.mxu0 0
    %416 = vmatpush1.bf16.msra.mxu0 %v381
    %417 = vmatprep.subr.bf16.mxu0 0
    %418 = vmatpush1.bf16.msra.mxu0 %v382
    %419 = vmatprep.subr.bf16.mxu0 0
    %420 = vmatpush1.bf16.msra.mxu0 %v383
    %421 = vmatprep.subr.bf16.mxu0 0
    %422 = vmatpush1.bf16.msra.mxu0 %v384
    %423 = vmatprep.subr.bf16.mxu0 0
    %424 = vmatpush1.bf16.msra.mxu0 %v385
    %425 = vmatprep.subr.bf16.mxu0 0
    %426 = vmatpush1.bf16.msra.mxu0 %v386
    %427 = vmatprep.subr.bf16.mxu0 0
    %428 = vmatpush1.bf16.msra.mxu0 %v387
    %429 = vmatprep.subr.bf16.mxu0 0
    %430 = vmatpush1.bf16.msra.mxu0 %v388
    %431 = vmatprep.subr.bf16.mxu0 0
    %432 = vmatpush1.bf16.msra.mxu0 %v389
    %433 = vmatprep.subr.bf16.mxu0 0
    %434 = vmatpush1.bf16.msra.mxu0 %v390
    %435 = vmatprep.subr.bf16.mxu0 0
    %436 = vmatpush1.bf16.msra.mxu0 %v391
    %437 = vmatprep.subr.bf16.mxu0 0
    %438 = vmatpush1.bf16.msra.mxu0 %v392
    %439 = vmatprep.subr.bf16.mxu0 0
    %440 = vmatpush1.bf16.msra.mxu0 %v393
    %441 = vmatprep.subr.bf16.mxu0 0
    %442 = vmatpush1.bf16.msra.mxu0 %v394
    %443 = vmatprep.mubr.bf16.mxu0 %v275
    %444 = vmatmul.mubr.bf16.gmra.mrb[0].mxu0 %v274
    %v445 = vpop.f32.mrb[0].mxu0
    %v446 = vadd.f32 %v313, %v445
    %v447 = vpop.f32.mrb[0].mxu0
    %v448 = vpop.f32.mrb[0].mxu0
    %v449 = vadd.f32 %v313, %v448
    %v450 = vpop.f32.mrb[0].mxu0
    %451 = vdwg.mxu0
    %v452 = vadd.f32 %v446, %v69
    %v453 = vadd.f32 %v449, %v70
    %454 = vst [vmem:[#allocation8] sm:$0xff] %v452
    %455 = vst [vmem:[#allocation8 + $0x8] sm:$0xff] %v453
    // Predicated region
    $region42: #{tpu_custom_call.1} parent=1 // pred_check
      _
    $region43: #{tpu_custom_call.1} parent=1 // pred_check_branch
      %457 = sbr.rel (0) target = $region45
    $region44: #{tpu_custom_call.1} parent=1 // pred_region
      %s459 = ssub.s32 256, 256
      %460 = vsyncadd [#allocation4], %s459
      %s461 = sshll.u32 [#allocation8], 4
      %s462 = int_to_ptr.vmem [resolvable:$true] %s461
      %467 = dma.vmem_to_hbm [thread:$0]  %s462, 256, %s7, [#allocation4], 128, 128, 8
    $region45: #{tpu_custom_call.1} parent=1 // pred_fallthru
      _
    // Predicated region
    $region46: #{tpu_custom_call.1} parent=1 // pred_check
      _
    $region47: #{tpu_custom_call.1} parent=1 // pred_check_branch
      %469 = sbr.rel (0) target = $region49
    $region48: #{tpu_custom_call.1} parent=1 // pred_region
      %470 = dma.done [#allocation4], 256
    $region49: #{tpu_custom_call.1} parent=1 // pred_fallthru
      _
    %471 = vsyncpa [#allocation3], 1
    %472 = vsyncpa [#allocation6], 1
    %473 = vsyncpa [#allocation4], 1

// kernel: tpu_custom_call.1
$region0: #{tpu_custom_call.1}
  #allocation0 [shape = 'u32[]', space=smem, size = 0x4, offset = 0x4, fixed_abs, tag = 'smem constant byte address 0x4 - core index']
  #allocation1 [shape = 'u32[144,128]{1,0:T(1,128)}', space=vmem, size = 0x12000, scoped, tag = 'internal scratch']
  %s0 = inlined_call_operand.hbm [shape: f32[16,128], index: 0, kind: input, shape index: {}]
  %s1 = inlined_call_operand.vmem [shape: f32[1,128], index: 1, kind: input, shape index: {}]
  %s2 = inlined_call_operand.vmem [shape: f32[1,128], index: 2, kind: input, shape index: {}]
  %s3 = inlined_call_operand.hbm [shape: bf16[128,256], index: 3, kind: input, shape index: {}]
  %s4 = inlined_call_operand.vmem [shape: f32[1,256], index: 4, kind: input, shape index: {}]
  %s5 = inlined_call_operand.hbm [shape: bf16[256,128], index: 5, kind: input, shape index: {}]
  %s6 = inlined_call_operand.vmem [shape: f32[1,128], index: 6, kind: input, shape index: {}]
  %s7 = inlined_call_operand.hbm [shape: f32[16,128], index: 7, kind: output, shape index: {}]
  %s8 = sld [smem:[#allocation0]]
  $region50: #{tpu_custom_call.1} parent=0
    _
  %s10 = ssub.s32 1, %s8
  %s11 = scalar_select 0, %s10, %s8
  $region1: #{tpu_custom_call.1} parent=0
    #allocation2 [shape = 'u8[8192]{0}', space=vmem, size = 0x2000, scoped, tag = 'input window, operand 0, single buffered']
    #allocation3 [shape = 's32[1]{0}', space=sflag, size = 0x4, scoped, tag = 'scoped memory for tpu_custom_call.1']
    #allocation4 [shape = 's32[1]{0}', space=sflag, size = 0x4, scoped, tag = 'scoped memory for tpu_custom_call.1']
    #allocation5 [shape = 'u8[65536]{0}', space=vmem, size = 0x10000, scoped, tag = 'input window, operand 3, single buffered']
    #allocation6 [shape = 's32[1]{0}', space=sflag, size = 0x4, scoped, tag = 'scoped memory for tpu_custom_call.1']
    #allocation7 [shape = 'u8[65536]{0}', space=vmem, size = 0x10000, scoped, tag = 'input window, operand 5, single buffered']
    #allocation8 [shape = 'u8[8192]{0}', space=vmem, size = 0x2000, scoped, tag = 'output window, operand 0, single buffered']
    %12 = vsyncpa [#allocation3], 0
    %13 = vsyncpa [#allocation6], 0
    %14 = vsyncpa [#allocation4], 0
    // Predicated region
    $region2: #{tpu_custom_call.1} parent=1 // pred_check
      _
    $region3: #{tpu_custom_call.1} parent=1 // pred_check_branch
      %16 = sbr.rel (0) target = $region5
    $region4: #{tpu_custom_call.1} parent=1 // pred_region
      %s18 = ssub.s32 256, 256
      %19 = vsyncadd [#allocation3], %s18
      %s20 = sshll.u32 [#allocation2], 4
      %s21 = int_to_ptr.vmem [resolvable:$true] %s20
      %26 = dma.hbm_to_vmem [thread:$0]  %s0, 256, %s21, [#allocation3], 128, 128, 8
    $region5: #{tpu_custom_call.1} parent=1 // pred_fallthru
      _
    // Predicated region
    $region6: #{tpu_custom_call.1} parent=1 // pred_check
      _
    $region7: #{tpu_custom_call.1} parent=1 // pred_check_branch
      %28 = sbr.rel (0) target = $region9
    $region8: #{tpu_custom_call.1} parent=1 // pred_region
      _
    $region9: #{tpu_custom_call.1} parent=1 // pred_fallthru
      _
    // Predicated region
    $region10: #{tpu_custom_call.1} parent=1 // pred_check
      _
    $region11: #{tpu_custom_call.1} parent=1 // pred_check_branch
      %30 = sbr.rel (0) target = $region13
    $region12: #{tpu_custom_call.1} parent=1 // pred_region
      _
    $region13: #{tpu_custom_call.1} parent=1 // pred_fallthru
      _
    // Predicated region
    $region14: #{tpu_custom_call.1} parent=1 // pred_check
      _
    $region15: #{tpu_custom_call.1} parent=1 // pred_check_branch
      %32 = sbr.rel (0) target = $region17
    $region16: #{tpu_custom_call.1} parent=1 // pred_region
      %s34 = ssub.s32 2048, 2048
      %35 = vsyncadd [#allocation6], %s34
      %s36 = sshll.u32 [#allocation5], 4
      %s37 = int_to_ptr.vmem [resolvable:$true] %s36
      %42 = dma.hbm_to_vmem [thread:$0]  %s3, 2048, %s37, [#allocation6], 128, 128, 8
    $region17: #{tpu_custom_call.1} parent=1 // pred_fallthru
      _
    // Predicated region
    $region18: #{tpu_custom_call.1} parent=1 // pred_check
      _
    $region19: #{tpu_custom_call.1} parent=1 // pred_check_branch
      %44 = sbr.rel (0) target = $region21
    $region20: #{tpu_custom_call.1} parent=1 // pred_region
      _
    $region21: #{tpu_custom_call.1} parent=1 // pred_fallthru
      _
    // Predicated region
    $region22: #{tpu_custom_call.1} parent=1 // pred_check
      _
    $region23: #{tpu_custom_call.1} parent=1 // pred_check_branch
      %46 = sbr.rel (0) target = $region25
    $region24: #{tpu_custom_call.1} parent=1 // pred_region
      %s48 = ssub.s32 2048, 2048
      %49 = vsyncadd [#allocation6], %s48
      %s50 = sshll.u32 [#allocation7], 4
      %s51 = int_to_ptr.vmem [resolvable:$true] %s50
      %56 = dma.hbm_to_vmem [thread:$0]  %s5, 2048, %s51, [#allocation6], 64, 64, 4
    $region25: #{tpu_custom_call.1} parent=1 // pred_fallthru
      _
    // Predicated region
    $region26: #{tpu_custom_call.1} parent=1 // pred_check
      _
    $region27: #{tpu_custom_call.1} parent=1 // pred_check_branch
      %58 = sbr.rel (0) target = $region29
    $region28: #{tpu_custom_call.1} parent=1 // pred_region
      _
    $region29: #{tpu_custom_call.1} parent=1 // pred_fallthru
      _
    // Predicated region
    $region30: #{tpu_custom_call.1} parent=1 // pred_check
      _
    $region31: #{tpu_custom_call.1} parent=1 // pred_check_branch
      %60 = sbr.rel (0) target = $region33
    $region32: #{tpu_custom_call.1} parent=1 // pred_region
      %61 = dma.done [#allocation3], 256
    $region33: #{tpu_custom_call.1} parent=1 // pred_fallthru
      _
    // Predicated region
    $region34: #{tpu_custom_call.1} parent=1 // pred_check
      _
    $region35: #{tpu_custom_call.1} parent=1 // pred_check_branch
      %63 = sbr.rel (0) target = $region37
    $region36: #{tpu_custom_call.1} parent=1 // pred_region
      %64 = dma.done [#allocation6], 2048
    $region37: #{tpu_custom_call.1} parent=1 // pred_fallthru
      _
    // Predicated region
    $region38: #{tpu_custom_call.1} parent=1 // pred_check
      _
    $region39: #{tpu_custom_call.1} parent=1 // pred_check_branch
      %66 = sbr.rel (0) target = $region41
    $region40: #{tpu_custom_call.1} parent=1 // pred_region
      %67 = dma.done [#allocation6], 2048
    $region41: #{tpu_custom_call.1} parent=1 // pred_fallthru
      _
    %v69 = vld [vmem:[#allocation2] sm:$0xff]
    %v70 = vld [vmem:[#allocation2 + $0x8] sm:$0xff]
    %v71 = vld [vmem:[%s1] sm:$0x1]
    %v72 = vld [vmem:[%s2] sm:$0x1]
    %73 = vadd.xlane.f32.xlu0 %v69
    %v74 = vpop.xlane.xlu0 %73
    %75 = vadd.xlane.f32.xlu0 %v70
    %v76 = vpop.xlane.xlu0 %75
    %v77 = vmul.f32 %v74, 0.015625
    %v78 = vmul.f32 %v76, 0.015625
    %v79 = vsub.f32 %v69, %v77
    %v80 = vsub.f32 %v70, %v78
    %v81 = vlaneseq
    %v82 = vand.u32 %v81, 127
    %vm83 = vcmp.lt.s32.totalorder %v82, 64
    %v84 = vsel %vm83, 1, 0
    %vm85 = vcmp.eq.s32.totalorder %v84, 1
    %v86 = vsel %vm85, %v79, 0.0
    %v87 = vsel %vm85, %v80, 0.0
    %v88 = vmul.f32 %v86, %v86
    %v89 = vmul.f32 %v87, %v87
    %90 = vadd.xlane.f32.xlu0 %v88
    %v91 = vpop.xlane.xlu0 %90
    %92 = vadd.xlane.f32.xlu0 %v89
    %v93 = vpop.xlane.xlu0 %92
    %v94 = vmul.f32 %v91, 0.015625
    %v95 = vmul.f32 %v93, 0.015625
    %v96 = vadd.f32 %v94, 1e-05
    %v97 = vadd.f32 %v95, 1e-05
    %v98 = vrsqrt.pop %v96
    %v99 = vrsqrt.pop %v97
    %v100 = vmul.f32 %v86, %v98
    %v101 = vmul.f32 %v87, %v99
    %v103 = vlaneseq
    %v104 = vshrl.u32 %v103, 7
    %v105 = vsub.s32 0, %v104
    %v106 = vrot.slane %v71, %v105
    %v108 = vmul.f32 %v100, %v106
    %v109 = vmul.f32 %v101, %v106
    %v111 = vlaneseq
    %v112 = vshrl.u32 %v111, 7
    %v113 = vsub.s32 0, %v112
    %v114 = vrot.slane %v72, %v113
    %v116 = vadd.f32 %v108, %v114
    %v117 = vadd.f32 %v109, %v114
    %v118 = vpack.c.bf16 %v117, %v116
    %v119 = vld [vmem:[#allocation5] sm:$0xff]
    %v120 = vld [vmem:[#allocation5 + $0x8] sm:$0xff]
    %v121 = vld [vmem:[#allocation5 + $0x10] sm:$0xff]
    %v122 = vld [vmem:[#allocation5 + $0x18] sm:$0xff]
    %v123 = vld [vmem:[#allocation5 + $0x20] sm:$0xff]
    %v124 = vld [vmem:[#allocation5 + $0x28] sm:$0xff]
    %v125 = vld [vmem:[#allocation5 + $0x30] sm:$0xff]
    %v126 = vld [vmem:[#allocation5 + $0x38] sm:$0xff]
    %v127 = vld [vmem:[#allocation5 + $0x40] sm:$0xff]
    %v128 = vld [vmem:[#allocation5 + $0x48] sm:$0xff]
    %v129 = vld [vmem:[#allocation5 + $0x50] sm:$0xff]
    %v130 = vld [vmem:[#allocation5 + $0x58] sm:$0xff]
    %v131 = vld [vmem:[#allocation5 + $0x60] sm:$0xff]
    %v132 = vld [vmem:[#allocation5 + $0x68] sm:$0xff]
    %v133 = vld [vmem:[#allocation5 + $0x70] sm:$0xff]
    %v134 = vld [vmem:[#allocation5 + $0x78] sm:$0xff]
    %v135 = vld [vmem:[%s4] sm:$0x3]
    %v137 = vlaneseq
    %v138 = vshrl.u32 %v137, 7
    %v139 = vsub.s32 0, %v138
    %v140 = vrot.slane %v135, %v139
    %v141 = vlaneseq
    %v142 = vshrl.u32 %v141, 7
    %v143 = vsub.s32 1, %v142
    %v144 = vrot.slane %v135, %v143
    %v163 = vunpack.c.l.b16 %v119
    %v164 = vunpack.c.h.b16 %v119
    %v165 = vunpack.c.l.b16 %v120
    %v166 = vunpack.c.h.b16 %v120
    %v167 = vunpack.c.l.b16 %v121
    %v168 = vunpack.c.h.b16 %v121
    %v169 = vunpack.c.l.b16 %v122
    %v170 = vunpack.c.h.b16 %v122
    %v171 = vunpack.c.l.b16 %v123
    %v172 = vunpack.c.h.b16 %v123
    %v173 = vunpack.c.l.b16 %v124
    %v174 = vunpack.c.h.b16 %v124
    %v175 = vunpack.c.l.b16 %v125
    %v176 = vunpack.c.h.b16 %v125
    %v177 = vunpack.c.l.b16 %v126
    %v178 = vunpack.c.h.b16 %v126
    %v179 = vunpack.c.l.b16 %v127
    %v180 = vunpack.c.h.b16 %v127
    %v181 = vunpack.c.l.b16 %v128
    %v182 = vunpack.c.h.b16 %v128
    %v183 = vunpack.c.l.b16 %v129
    %v184 = vunpack.c.h.b16 %v129
    %v185 = vunpack.c.l.b16 %v130
    %v186 = vunpack.c.h.b16 %v130
    %v187 = vunpack.c.l.b16 %v131
    %v188 = vunpack.c.h.b16 %v131
    %v189 = vunpack.c.l.b16 %v132
    %v190 = vunpack.c.h.b16 %v132
    %v191 = vunpack.c.l.b16 %v133
    %v192 = vunpack.c.h.b16 %v133
    %v193 = vunpack.c.l.b16 %v134
    %v194 = vunpack.c.h.b16 %v134
    %v195 = vpack.c.b16 %v165, %v163
    %v196 = vpack.c.b16 %v166, %v164
    %v197 = vpack.c.b16 %v169, %v167
    %v198 = vpack.c.b16 %v170, %v168
    %v199 = vpack.c.b16 %v173, %v171
    %v200 = vpack.c.b16 %v174, %v172
    %v201 = vpack.c.b16 %v177, %v175
    %v202 = vpack.c.b16 %v178, %v176
    %v203 = vpack.c.b16 %v181, %v179
    %v204 = vpack.c.b16 %v182, %v180
    %v205 = vpack.c.b16 %v185, %v183
    %v206 = vpack.c.b16 %v186, %v184
    %v207 = vpack.c.b16 %v189, %v187
    %v208 = vpack.c.b16 %v190, %v188
    %v209 = vpack.c.b16 %v193, %v191
    %v210 = vpack.c.b16 %v194, %v192
    %227 = vmatprep.subr.bf16.mxu0 %v196
    %228 = vmatpush1.bf16.msra.mxu0 %v195
    %229 = vmatprep.subr.bf16.mxu0 %v198
    %230 = vmatpush1.bf16.msra.mxu0 %v197
    %231 = vmatprep.subr.bf16.mxu0 %v200
    %232 = vmatpush1.bf16.msra.mxu0 %v199
    %233 = vmatprep.subr.bf16.mxu0 %v202
    %234 = vmatpush1.bf16.msra.mxu0 %v201
    %235 = vmatprep.subr.bf16.mxu0 %v204
    %236 = vmatpush1.bf16.msra.mxu0 %v203
    %237 = vmatprep.subr.bf16.mxu0 %v206
    %238 = vmatpush1.bf16.msra.mxu0 %v205
    %239 = vmatprep.subr.bf16.mxu0 %v208
    %240 = vmatpush1.bf16.msra.mxu0 %v207
    %241 = vmatprep.subr.bf16.mxu0 %v210
    %242 = vmatpush1.bf16.msra.mxu0 %v209
    %243 = vmatprep.subr.bf16.mxu0 0
    %244 = vmatpush1.bf16.msra.mxu0 0
    %245 = vmatprep.subr.bf16.mxu0 0
    %246 = vmatpush1.bf16.msra.mxu0 0
    %247 = vmatprep.subr.bf16.mxu0 0
    %248 = vmatpush1.bf16.msra.mxu0 0
    %249 = vmatprep.subr.bf16.mxu0 0
    %250 = vmatpush1.bf16.msra.mxu0 0
    %251 = vmatprep.subr.bf16.mxu0 0
    %252 = vmatpush1.bf16.msra.mxu0 0
    %253 = vmatprep.subr.bf16.mxu0 0
    %254 = vmatpush1.bf16.msra.mxu0 0
    %255 = vmatprep.subr.bf16.mxu0 0
    %256 = vmatpush1.bf16.msra.mxu0 0
    %257 = vmatprep.subr.bf16.mxu0 0
    %258 = vmatpush1.bf16.msra.mxu0 0
    %259 = vmatprep.mubr.bf16.mxu0 0
    %260 = vmatmul.mubr.bf16.gmra.mrb[0].mxu0 %v118
    %v261 = vpop.f32.mrb[0].mxu0
    %v262 = vadd.f32 %v140, %v261
    %v263 = vpop.f32.mrb[0].mxu0
    %v264 = vadd.f32 %v144, %v263
    %v265 = vpop.f32.mrb[0].mxu0
    %v266 = vadd.f32 %v140, %v265
    %v267 = vpop.f32.mrb[0].mxu0
    %v268 = vadd.f32 %v144, %v267
    %269 = vdwg.mxu0
    %v270 = vmax.f32 %v262, 0.0
    %v271 = vmax.f32 %v264, 0.0
    %v272 = vmax.f32 %v266, 0.0
    %v273 = vmax.f32 %v268, 0.0
    %v274 = vpack.c.bf16 %v272, %v270
    %v275 = vpack.c.bf16 %v273, %v271
    %v276 = vld [vmem:[#allocation7] sm:$0xf]
    %v277 = vld [vmem:[#allocation7 + $0x4] sm:$0xf]
    %v278 = vld [vmem:[#allocation7 + $0x8] sm:$0xf]
    %v279 = vld [vmem:[#allocation7 + $0xc] sm:$0xf]
    %v280 = vld [vmem:[#allocation7 + $0x10] sm:$0xf]
    %v281 = vld [vmem:[#allocation7 + $0x14] sm:$0xf]
    %v282 = vld [vmem:[#allocation7 + $0x18] sm:$0xf]
    %v283 = vld [vmem:[#allocation7 + $0x1c] sm:$0xf]
    %v284 = vld [vmem:[#allocation7 + $0x20] sm:$0xf]
    %v285 = vld [vmem:[#allocation7 + $0x24] sm:$0xf]
    %v286 = vld [vmem:[#allocation7 + $0x28] sm:$0xf]
    %v287 = vld [vmem:[#allocation7 + $0x2c] sm:$0xf]
    %v288 = vld [vmem:[#allocation7 + $0x30] sm:$0xf]
    %v289 = vld [vmem:[#allocation7 + $0x34] sm:$0xf]
    %v290 = vld [vmem:[#allocation7 + $0x38] sm:$0xf]
    %v291 = vld [vmem:[#allocation7 + $0x3c] sm:$0xf]
    %v292 = vld [vmem:[#allocation7 + $0x40] sm:$0xf]
    %v293 = vld [vmem:[#allocation7 + $0x44] sm:$0xf]
    %v294 = vld [vmem:[#allocation7 + $0x48] sm:$0xf]
    %v295 = vld [vmem:[#allocation7 + $0x4c] sm:$0xf]
    %v296 = vld [vmem:[#allocation7 + $0x50] sm:$0xf]
    %v297 = vld [vmem:[#allocation7 + $0x54] sm:$0xf]
    %v298 = vld [vmem:[#allocation7 + $0x58] sm:$0xf]
    %v299 = vld [vmem:[#allocation7 + $0x5c] sm:$0xf]
    %v300 = vld [vmem:[#allocation7 + $0x60] sm:$0xf]
    %v301 = vld [vmem:[#allocation7 + $0x64] sm:$0xf]
    %v302 = vld [vmem:[#allocation7 + $0x68] sm:$0xf]
    %v303 = vld [vmem:[#allocation7 + $0x6c] sm:$0xf]
    %v304 = vld [vmem:[#allocation7 + $0x70] sm:$0xf]
    %v305 = vld [vmem:[#allocation7 + $0x74] sm:$0xf]
    %v306 = vld [vmem:[#allocation7 + $0x78] sm:$0xf]
    %v307 = vld [vmem:[#allocation7 + $0x7c] sm:$0xf]
    %v308 = vld [vmem:[%s6] sm:$0x1]
    %v310 = vlaneseq
    %v311 = vshrl.u32 %v310, 7
    %v312 = vsub.s32 0, %v311
    %v313 = vrot.slane %v308, %v312
    %v347 = vunpack.c.l.b16 %v276
    %v348 = vunpack.c.l.b16 %v277
    %v349 = vunpack.c.l.b16 %v278
    %v350 = vunpack.c.l.b16 %v279
    %v351 = vunpack.c.l.b16 %v280
    %v352 = vunpack.c.l.b16 %v281
    %v353 = vunpack.c.l.b16 %v282
    %v354 = vunpack.c.l.b16 %v283
    %v355 = vunpack.c.l.b16 %v284
    %v356 = vunpack.c.l.b16 %v285
    %v357 = vunpack.c.l.b16 %v286
    %v358 = vunpack.c.l.b16 %v287
    %v359 = vunpack.c.l.b16 %v288
    %v360 = vunpack.c.l.b16 %v289
    %v361 = vunpack.c.l.b16 %v290
    %v362 = vunpack.c.l.b16 %v291
    %v363 = vunpack.c.l.b16 %v292
    %v364 = vunpack.c.l.b16 %v293
    %v365 = vunpack.c.l.b16 %v294
    %v366 = vunpack.c.l.b16 %v295
    %v367 = vunpack.c.l.b16 %v296
    %v368 = vunpack.c.l.b16 %v297
    %v369 = vunpack.c.l.b16 %v298
    %v370 = vunpack.c.l.b16 %v299
    %v371 = vunpack.c.l.b16 %v300
    %v372 = vunpack.c.l.b16 %v301
    %v373 = vunpack.c.l.b16 %v302
    %v374 = vunpack.c.l.b16 %v303
    %v375 = vunpack.c.l.b16 %v304
    %v376 = vunpack.c.l.b16 %v305
    %v377 = vunpack.c.l.b16 %v306
    %v378 = vunpack.c.l.b16 %v307
    %v379 = vpack.c.b16 %v348, %v347
    %v380 = vpack.c.b16 %v350, %v349
    %v381 = vpack.c.b16 %v352, %v351
    %v382 = vpack.c.b16 %v354, %v353
    %v383 = vpack.c.b16 %v356, %v355
    %v384 = vpack.c.b16 %v358, %v357
    %v385 = vpack.c.b16 %v360, %v359
    %v386 = vpack.c.b16 %v362, %v361
    %v387 = vpack.c.b16 %v364, %v363
    %v388 = vpack.c.b16 %v366, %v365
    %v389 = vpack.c.b16 %v368, %v367
    %v390 = vpack.c.b16 %v370, %v369
    %v391 = vpack.c.b16 %v372, %v371
    %v392 = vpack.c.b16 %v374, %v373
    %v393 = vpack.c.b16 %v376, %v375
    %v394 = vpack.c.b16 %v378, %v377
    %411 = vmatprep.subr.bf16.mxu0 0
    %412 = vmatpush1.bf16.msra.mxu0 %v379
    %413 = vmatprep.subr.bf16.mxu0 0
    %414 = vmatpush1.bf16.msra.mxu0 %v380
    %415 = vmatprep.subr.bf16.mxu0 0
    %416 = vmatpush1.bf16.msra.mxu0 %v381
    %417 = vmatprep.subr.bf16.mxu0 0
    %418 = vmatpush1.bf16.msra.mxu0 %v382
    %419 = vmatprep.subr.bf16.mxu0 0
    %420 = vmatpush1.bf16.msra.mxu0 %v383
    %421 = vmatprep.subr.bf16.mxu0 0
    %422 = vmatpush1.bf16.msra.mxu0 %v384
    %423 = vmatprep.subr.bf16.mxu0 0
    %424 = vmatpush1.bf16.msra.mxu0 %v385
    %425 = vmatprep.subr.bf16.mxu0 0
    %426 = vmatpush1.bf16.msra.mxu0 %v386
    %427 = vmatprep.subr.bf16.mxu0 0
    %428 = vmatpush1.bf16.msra.mxu0 %v387
    %429 = vmatprep.subr.bf16.mxu0 0
    %430 = vmatpush1.bf16.msra.mxu0 %v388
    %431 = vmatprep.subr.bf16.mxu0 0
    %432 = vmatpush1.bf16.msra.mxu0 %v389
    %433 = vmatprep.subr.bf16.mxu0 0
    %434 = vmatpush1.bf16.msra.mxu0 %v390
    %435 = vmatprep.subr.bf16.mxu0 0
    %436 = vmatpush1.bf16.msra.mxu0 %v391
    %437 = vmatprep.subr.bf16.mxu0 0
    %438 = vmatpush1.bf16.msra.mxu0 %v392
    %439 = vmatprep.subr.bf16.mxu0 0
    %440 = vmatpush1.bf16.msra.mxu0 %v393
    %441 = vmatprep.subr.bf16.mxu0 0
    %442 = vmatpush1.bf16.msra.mxu0 %v394
    %443 = vmatprep.mubr.bf16.mxu0 %v275
    %444 = vmatmul.mubr.bf16.gmra.mrb[0].mxu0 %v274
    %v445 = vpop.f32.mrb[0].mxu0
    %v446 = vadd.f32 %v313, %v445
    %v447 = vpop.f32.mrb[0].mxu0
    %v448 = vpop.f32.mrb[0].mxu0
    %v449 = vadd.f32 %v313, %v448
    %v450 = vpop.f32.mrb[0].mxu0
    %451 = vdwg.mxu0
    %v452 = vadd.f32 %v446, %v69
    %v453 = vadd.f32 %v449, %v70
    %454 = vst [vmem:[#allocation8] sm:$0xff] %v452
    %455 = vst [vmem:[#allocation8 + $0x8] sm:$0xff] %v453
    // Predicated region
    $region42: #{tpu_custom_call.1} parent=1 // pred_check
      _
    $region43: #{tpu_custom_call.1} parent=1 // pred_check_branch
      %457 = sbr.rel (0) target = $region45
    $region44: #{tpu_custom_call.1} parent=1 // pred_region
      %s459 = ssub.s32 256, 256
      %460 = vsyncadd [#allocation4], %s459
      %s461 = sshll.u32 [#allocation8], 4
      %s462 = int_to_ptr.vmem [resolvable:$true] %s461
      %467 = dma.vmem_to_hbm [thread:$0]  %s462, 256, %s7, [#allocation4], 128, 128, 8
    $region45: #{tpu_custom_call.1} parent=1 // pred_fallthru
      _
    // Predicated region
    $region46: #{tpu_custom_call.1} parent=1 // pred_check
      _
    $region47: #{tpu_custom_call.1} parent=1 // pred_check_branch
      %469 = sbr.rel (0) target = $region49
    $region48: #{tpu_custom_call.1} parent=1 // pred_region
      %470 = dma.done [#allocation4], 256
    $region49: #{tpu_custom_call.1} parent=1 // pred_fallthru
      _
    %471 = vsyncpa [#allocation3], 1
    %472 = vsyncpa [#allocation6], 1
    %473 = vsyncpa [#allocation4], 1

</llo_original>
